<compile_context>
chip_gen: v5e
topology: v5e:2x2
jax: 0.10.0
libtpu: 0.0.40
codegen_flags: <defaults>
</compile_context>

<pallas_src>
import jax
import jax.numpy as jnp
from jax.experimental import pallas as pl
from jax.experimental.pallas import tpu as pltpu

BN_EPS = 1e-5


def _round_up(a, m):
    return (a + m - 1) // m * m


def deepfm_kernel(emb_ref, lin_ref, wcat_ref, b1_ref, w2_ref, b2_ref,
                  wo_ref, bo_ref, out_ref):
    h1_dim = b1_ref.shape[0]
    d_dim = wcat_ref.shape[0] - h1_dim

    # (K, TB) bf16 in HBM -> f32 in-register (v5e VPU has no bf16; matmuls are f32).
    flat = emb_ref[...].astype(jnp.float32)

    # One MXU pass over the dominant operand: rows [0:D] are the 0/1 FM summation
    # matrix, rows [D:D+H1] are the (BN-folded) first MLP layer.
    z = jnp.dot(wcat_ref[...], flat, preferred_element_type=jnp.float32)   # (D+H1, TB)

    # ---- FactorizationMachine (reduce_sum=True):
    #      fm = 0.5 * (sum_d s_d^2 - sum_k e_k^2), s_d = sum_f e_{f,d}
    s = z[:d_dim]                                                          # (D, TB)
    fm = 0.5 * (jnp.sum(s * s, axis=0, keepdims=True)
                - jnp.sum(flat * flat, axis=0, keepdims=True))             # (1, TB)

    # ---- MLP: (Linear + folded BN + ReLU) x2, dropout identity in eval mode.
    h = jnp.maximum(z[d_dim:] + b1_ref[...], 0.0)                          # (H1, TB)
    h = jnp.dot(w2_ref[...], h, preferred_element_type=jnp.float32) + b2_ref[...]
    h = jnp.maximum(h, 0.0)                                                # (H2, TB)

    # ---- final Linear(H2 -> 1): VPU broadcast-mul + XLU sublane reduce (no N=1 MXU op)
    y = jnp.sum(h * wo_ref[...], axis=0, keepdims=True) + bo_ref[...]      # (1, TB)

    # ---- lane-dense output row: first-order + FM + deep branch
    out_ref[...] = lin_ref[...] + fm + y


def make_params(key, field_dims, dim, mlp_dims):
    total = int(sum(field_dims))
    embed_out = len(field_dims) * dim
    keys = jax.random.split(key, 8)
    p = {}
    p["emb_table"] = 0.01 * jax.random.normal(keys[0], (total, dim), jnp.float32)
    p["lin_table"] = 0.01 * jax.random.normal(keys[1], (total, 1), jnp.float32)
    p["lin_bias"] = jnp.zeros((1, 1), jnp.float32)
    dims = [embed_out] + list(mlp_dims)
    for i in range(len(mlp_dims)):
        p[f"w{i+1}"] = 0.05 * jax.random.normal(keys[2 + i], (dims[i], dims[i + 1]), jnp.float32)
        p[f"b{i+1}"] = jnp.zeros((1, dims[i + 1]), jnp.float32)
        # BatchNorm1d default init + running stats (eval mode)
        p[f"g{i+1}"] = jnp.ones((1, dims[i + 1]), jnp.float32)
        p[f"bt{i+1}"] = jnp.zeros((1, dims[i + 1]), jnp.float32)
        p[f"m{i+1}"] = jnp.zeros((1, dims[i + 1]), jnp.float32)
        p[f"v{i+1}"] = jnp.ones((1, dims[i + 1]), jnp.float32)
    p["w_out"] = 0.05 * jax.random.normal(keys[-1], (dims[-1], 1), jnp.float32)
    p["b_out"] = jnp.zeros((1, 1), jnp.float32)
    return p


def _fold_bn(w, b, g, bt, m, v):
    """Fold eval-mode BatchNorm1d into the preceding Linear (exact in eval mode)."""
    scale = g / jnp.sqrt(v + BN_EPS)          # (1, H)
    return w * scale, (b - m) * scale + bt    # (K, H), (1, H)


def deepfm_forward(x, params, field_dims, dim, tile_b=8192):
    B, F = x.shape
    K = F * dim                                 # embed_output_dim (128 in demo)
    H1 = params["w1"].shape[1]
    H2 = params["w2"].shape[1]
    assert params["w1"].shape[0] == K

    # ---- glue: index offsets (data-dependent gathers stay in XLA)
    offsets = jnp.concatenate(
        [jnp.zeros((1,), jnp.int32), jnp.cumsum(jnp.asarray(field_dims, jnp.int32))[:-1]])
    idx = x.astype(jnp.int32) + offsets[None, :]                  # (B, F)

    # batch padding to a multiple of the tile (multiple of 128: lane-dense batch axis)
    tile_b_eff = _round_up(min(tile_b, _round_up(B, 128)), 128)
    B_pad = _round_up(B, tile_b_eff)
    if B_pad != B:
        idx = jnp.pad(idx, ((0, B_pad - B), (0, 0)))              # padded rows gather row 0

    # ---- transposed (feature-major) bf16 embedding gather: (K, B_pad), row order d*F+f
    emb_t = params["emb_table"].astype(jnp.bfloat16).T            # (D, total) -- tiny
    embed_t = jnp.take(emb_t, idx.T, axis=1).reshape(K, B_pad)    # (K, B_pad) bf16

    # first-order linear term, reduced in glue, as a lane-dense row: (1, B_pad)
    lin = (jnp.sum(jnp.take(params["lin_table"], idx, axis=0)[..., 0], axis=1)
           + params["lin_bias"][0, 0]).reshape(1, B_pad).astype(jnp.float32)

    # ---- fold BatchNorm (eval) into the Linear layers
    w1f, b1f = _fold_bn(params["w1"], params["b1"], params["g1"],
                        params["bt1"], params["m1"], params["v1"])
    w2f, b2f = _fold_bn(params["w2"], params["b2"], params["g2"],
                        params["bt2"], params["m2"], params["v2"])

    # re-permute W1 rows from the PyTorch (f*D+d) order to the kernel's (d*F+f) order,
    # and fuse with the 0/1 FM summation matrix into one (D+H1, K) MXU constant.
    r = jnp.arange(K)
    perm = (r % F) * dim + (r // F)
    w1t = w1f[perm, :].T                                            # (H1, K)
    s2t = jnp.repeat(jnp.eye(dim, dtype=jnp.float32), F, axis=0).T  # (D, K)
    wcat = jnp.concatenate([s2t, w1t], axis=0)                      # (D+H1, K)

    grid = (B_pad // tile_b_eff,)
    bmap = lambda i: (0, i)       # batch-tiled (lane axis)
    cmap = lambda i: (0, 0)       # VMEM-resident constants

    out = pl.pallas_call(
        deepfm_kernel,
        out_shape=jax.ShapeDtypeStruct((1, B_pad), jnp.float32),
        grid=grid,
        in_specs=[
            pl.BlockSpec((K, tile_b_eff), bmap),        # embed_t (bf16, dominant stream)
            pl.BlockSpec((1, tile_b_eff), bmap),        # first-order term (lane-dense)
            pl.BlockSpec((dim + H1, K), cmap),          # fused [S ; W1] (resident)
            pl.BlockSpec((H1, 1), cmap),                # b1 column
            pl.BlockSpec((H2, H1), cmap),               # w2^T
            pl.BlockSpec((H2, 1), cmap),                # b2 column
            pl.BlockSpec((H2, 1), cmap),                # w_out column
            pl.BlockSpec((1, 1), cmap),                 # b_out
        ],
        out_specs=pl.BlockSpec((1, tile_b_eff), bmap),
        compiler_params=pltpu.CompilerParams(
            dimension_semantics=("parallel",),
            vmem_limit_bytes=48 * 1024 * 1024),
    )(embed_t, lin, wcat, b1f.T, w2f.T, b2f.T, params["w_out"], params["b_out"])

    return out[0, :B]                                              # squeeze(1) -> (B,)


def deepfm_reference(x, params, field_dims, dim):
    offsets = jnp.concatenate(
        [jnp.zeros((1,), jnp.int32), jnp.cumsum(jnp.asarray(field_dims, jnp.int32))[:-1]])
    idx = x.astype(jnp.int32) + offsets[None, :]
    e = jnp.take(params["emb_table"], idx, axis=0)
    lin = jnp.sum(jnp.take(params["lin_table"], idx, axis=0)[..., 0], axis=1, keepdims=True) \
        + params["lin_bias"]
    s = jnp.sum(e, axis=1)
    sq = jnp.sum(e * e, axis=1)
    fm = 0.5 * jnp.sum(s * s - sq, axis=-1, keepdims=True)
    h = e.reshape(x.shape[0], -1)
    for i in (1, 2):
        h = h @ params[f"w{i}"] + params[f"b{i}"]
        h = (h - params[f"m{i}"]) * jax.lax.rsqrt(params[f"v{i}"] + BN_EPS) \
            * params[f"g{i}"] + params[f"bt{i}"]
        h = jnp.maximum(h, 0.0)
    y = h @ params["w_out"] + params["b_out"]
    return (lin + fm + y)[:, 0]


if __name__ == "__main__":
    field_dims = (10, 20, 30, 40, 50, 60, 70, 80)   # 8 fields
    dim = 16
    mlp_dims = (64, 32)
    B = 8

    key = jax.random.PRNGKey(0)
    k_param, k_x = jax.random.split(key)
    params = make_params(k_param, field_dims, dim, mlp_dims)

    # deterministic integer inputs, each field index within its vocab
    maxes = jnp.asarray(field_dims, jnp.int32)[None, :]
    x = jax.random.randint(k_x, (B, len(field_dims)), 0, 1 << 20, jnp.int32) % maxes

    fwd = jax.jit(deepfm_forward, static_argnames=("field_dims", "dim", "tile_b"))
    out = jax.block_until_ready(fwd(x, params, field_dims=field_dims, dim=dim))

    ref = deepfm_reference(x, params, field_dims, dim)
    assert out.shape == (B,)
    # bf16 embedding storage -> loosened tolerance (review correctness note)
    assert jnp.allclose(out, ref, atol=2e-3, rtol=2e-2), (out, ref)
    print("KERNEL_OK")
</pallas_src>

<mosaic_0001>
module attributes {stable_mosaic.version = 11 : i64} {
  func.func @deepfm_kernel(%arg0: i32, %arg1: memref<128x128xbf16, #tpu.memory_space<vmem>>, %arg2: memref<1x128xf32, #tpu.memory_space<vmem>>, %arg3: memref<80x128xf32, #tpu.memory_space<vmem>>, %arg4: memref<64x1xf32, #tpu.memory_space<vmem>>, %arg5: memref<32x64xf32, #tpu.memory_space<vmem>>, %arg6: memref<32x1xf32, #tpu.memory_space<vmem>>, %arg7: memref<32x1xf32, #tpu.memory_space<vmem>>, %arg8: memref<1x1xf32, #tpu.memory_space<vmem>>, %arg9: memref<1x128xf32, #tpu.memory_space<vmem>>) attributes {dimension_semantics = [#tpu.dimension_semantics<parallel>], iteration_bounds = array<i64: 1>, scalar_prefetch = 0 : i64, scratch_operands = 0 : i64, tpu.core_type = #tpu.core_type<tc>, window_params = [{transform_indices = @transform_0, window_bounds = array<i64: 128, 128>}, {transform_indices = @transform_1, window_bounds = array<i64: 1, 128>}, {pipeline_mode = #tpu.pipeline_mode<synchronous>, transform_indices = @transform_2, window_bounds = array<i64: 80, 128>}, {pipeline_mode = #tpu.pipeline_mode<synchronous>, transform_indices = @transform_3, window_bounds = array<i64: 64, 1>}, {pipeline_mode = #tpu.pipeline_mode<synchronous>, transform_indices = @transform_4, window_bounds = array<i64: 32, 64>}, {pipeline_mode = #tpu.pipeline_mode<synchronous>, transform_indices = @transform_5, window_bounds = array<i64: 32, 1>}, {pipeline_mode = #tpu.pipeline_mode<synchronous>, transform_indices = @transform_6, window_bounds = array<i64: 32, 1>}, {pipeline_mode = #tpu.pipeline_mode<synchronous>, transform_indices = @transform_7, window_bounds = array<i64: 1, 1>}, {transform_indices = @transform_8, window_bounds = array<i64: 1, 128>}]} {
    %c0 = arith.constant 0 : index
    %c0_0 = arith.constant 0 : index
    %0 = vector.load %arg1[%c0, %c0_0] : memref<128x128xbf16, #tpu.memory_space<vmem>>, vector<128x128xbf16>
    %1 = arith.extf %0 : vector<128x128xbf16> to vector<128x128xf32>
    %c0_1 = arith.constant 0 : index
    %c0_2 = arith.constant 0 : index
    %2 = vector.load %arg3[%c0_1, %c0_2] : memref<80x128xf32, #tpu.memory_space<vmem>>, vector<80x128xf32>
    %cst = arith.constant dense<0.000000e+00> : vector<80x128xf32>
    %3 = tpu.matmul %2, %1, %cst {dimension_numbers = #tpu.dot_dimension_numbers<[1], [0], [0], [1], [0, 0, 1, 1], [], []>} : vector<80x128xf32>, vector<128x128xf32>, vector<80x128xf32> -> vector<80x128xf32>
    %4 = vector.extract_strided_slice %3 {offsets = [0, 0], sizes = [16, 128], strides = [1, 1]} : vector<80x128xf32> to vector<16x128xf32>
    %5 = arith.mulf %4, %4 : vector<16x128xf32>
    %cst_3 = arith.constant dense<0.000000e+00> : vector<128xf32>
    %6 = vector.multi_reduction <add>, %5, %cst_3 [0] : vector<16x128xf32> to vector<128xf32>
    %7 = vector.shape_cast %6 : vector<128xf32> to vector<1x128xf32>
    %8 = arith.mulf %1, %1 : vector<128x128xf32>
    %cst_4 = arith.constant dense<0.000000e+00> : vector<128xf32>
    %9 = vector.multi_reduction <add>, %8, %cst_4 [0] : vector<128x128xf32> to vector<128xf32>
    %10 = vector.shape_cast %9 : vector<128xf32> to vector<1x128xf32>
    %11 = arith.subf %7, %10 : vector<1x128xf32>
    %cst_5 = arith.constant 5.000000e-01 : f32
    %12 = vector.broadcast %cst_5 : f32 to vector<1x128xf32>
    %13 = arith.mulf %12, %11 : vector<1x128xf32>
    %14 = vector.extract_strided_slice %3 {offsets = [16, 0], sizes = [64, 128], strides = [1, 1]} : vector<80x128xf32> to vector<64x128xf32>
    %c0_6 = arith.constant 0 : index
    %c0_7 = arith.constant 0 : index
    %15 = vector.load %arg4[%c0_6, %c0_7] : memref<64x1xf32, #tpu.memory_space<vmem>>, vector<64x1xf32>
    %16 = vector.broadcast %15 : vector<64x1xf32> to vector<64x128xf32>
    %17 = arith.addf %14, %16 : vector<64x128xf32>
    %cst_8 = arith.constant 0.000000e+00 : f32
    %18 = vector.broadcast %cst_8 : f32 to vector<64x128xf32>
    %19 = arith.maximumf %17, %18 : vector<64x128xf32>
    %c0_9 = arith.constant 0 : index
    %c0_10 = arith.constant 0 : index
    %20 = vector.load %arg5[%c0_9, %c0_10] : memref<32x64xf32, #tpu.memory_space<vmem>>, vector<32x64xf32>
    %cst_11 = arith.constant dense<0.000000e+00> : vector<32x128xf32>
    %21 = tpu.matmul %20, %19, %cst_11 {dimension_numbers = #tpu.dot_dimension_numbers<[1], [0], [0], [1], [0, 0, 1, 1], [], []>} : vector<32x64xf32>, vector<64x128xf32>, vector<32x128xf32> -> vector<32x128xf32>
    %c0_12 = arith.constant 0 : index
    %c0_13 = arith.constant 0 : index
    %22 = vector.load %arg6[%c0_12, %c0_13] : memref<32x1xf32, #tpu.memory_space<vmem>>, vector<32x1xf32>
    %23 = vector.broadcast %22 : vector<32x1xf32> to vector<32x128xf32>
    %24 = arith.addf %21, %23 : vector<32x128xf32>
    %cst_14 = arith.constant 0.000000e+00 : f32
    %25 = vector.broadcast %cst_14 : f32 to vector<32x128xf32>
    %26 = arith.maximumf %24, %25 : vector<32x128xf32>
    %c0_15 = arith.constant 0 : index
    %c0_16 = arith.constant 0 : index
    %27 = vector.load %arg7[%c0_15, %c0_16] : memref<32x1xf32, #tpu.memory_space<vmem>>, vector<32x1xf32>
    %28 = vector.broadcast %27 : vector<32x1xf32> to vector<32x128xf32>
    %29 = arith.mulf %26, %28 : vector<32x128xf32>
    %cst_17 = arith.constant dense<0.000000e+00> : vector<128xf32>
    %30 = vector.multi_reduction <add>, %29, %cst_17 [0] : vector<32x128xf32> to vector<128xf32>
    %31 = vector.shape_cast %30 : vector<128xf32> to vector<1x128xf32>
    %c0_18 = arith.constant 0 : index
    %c0_19 = arith.constant 0 : index
    %32 = vector.load %arg8[%c0_18, %c0_19] : memref<1x1xf32, #tpu.memory_space<vmem>>, vector<1x1xf32>
    %33 = vector.broadcast %32 : vector<1x1xf32> to vector<1x128xf32>
    %34 = arith.addf %31, %33 : vector<1x128xf32>
    %c0_20 = arith.constant 0 : index
    %c0_21 = arith.constant 0 : index
    %35 = vector.load %arg2[%c0_20, %c0_21] : memref<1x128xf32, #tpu.memory_space<vmem>>, vector<1x128xf32>
    %36 = arith.addf %35, %13 : vector<1x128xf32>
    %37 = arith.addf %36, %34 : vector<1x128xf32>
    %c0_22 = arith.constant 0 : index
    %c0_23 = arith.constant 0 : index
    %38 = vector.load %arg9[%c0_22, %c0_23] : memref<1x128xf32, #tpu.memory_space<vmem>>, vector<1x128xf32>
    tpu.vector_store %arg9[%c0_22, %c0_23], %37 {strides = array<i32>} : memref<1x128xf32, #tpu.memory_space<vmem>>, vector<1x128xf32>,
    return
  }
  func.func @transform_0(%arg0: i32) -> (i32, i32) {
    %c0_i32 = arith.constant 0 : i32
    %c0_i32_0 = arith.constant 0 : i32
    return %c0_i32, %arg0 : i32, i32
  }
  func.func @transform_1(%arg0: i32) -> (i32, i32) {
    %c0_i32 = arith.constant 0 : i32
    %c0_i32_0 = arith.constant 0 : i32
    return %c0_i32, %arg0 : i32, i32
  }
  func.func @transform_2(%arg0: i32) -> (i32, i32) {
    %c0_i32 = arith.constant 0 : i32
    %c0_i32_0 = arith.constant 0 : i32
    %c0_i32_1 = arith.constant 0 : i32
    return %c0_i32, %c0_i32_0 : i32, i32
  }
  func.func @transform_3(%arg0: i32) -> (i32, i32) {
    %c0_i32 = arith.constant 0 : i32
    %c0_i32_0 = arith.constant 0 : i32
    %c0_i32_1 = arith.constant 0 : i32
    return %c0_i32, %c0_i32_0 : i32, i32
  }
  func.func @transform_4(%arg0: i32) -> (i32, i32) {
    %c0_i32 = arith.constant 0 : i32
    %c0_i32_0 = arith.constant 0 : i32
    %c0_i32_1 = arith.constant 0 : i32
    return %c0_i32, %c0_i32_0 : i32, i32
  }
  func.func @transform_5(%arg0: i32) -> (i32, i32) {
    %c0_i32 = arith.constant 0 : i32
    %c0_i32_0 = arith.constant 0 : i32
    %c0_i32_1 = arith.constant 0 : i32
    return %c0_i32, %c0_i32_0 : i32, i32
  }
  func.func @transform_6(%arg0: i32) -> (i32, i32) {
    %c0_i32 = arith.constant 0 : i32
    %c0_i32_0 = arith.constant 0 : i32
    %c0_i32_1 = arith.constant 0 : i32
    return %c0_i32, %c0_i32_0 : i32, i32
  }
  func.func @transform_7(%arg0: i32) -> (i32, i32) {
    %c0_i32 = arith.constant 0 : i32
    %c0_i32_0 = arith.constant 0 : i32
    %c0_i32_1 = arith.constant 0 : i32
    return %c0_i32, %c0_i32_0 : i32, i32
  }
  func.func @transform_8(%arg0: i32) -> (i32, i32) {
    %c0_i32 = arith.constant 0 : i32
    %c0_i32_0 = arith.constant 0 : i32
    return %c0_i32, %arg0 : i32, i32
  }
}

</mosaic_0001>

<llo_original>
// kernel: deepfm_forward.1
$region0: #{deepfm_forward.1}
  #allocation0 [shape = 'u32[]', space=smem, size = 0x4, offset = 0x4, fixed_abs, tag = 'smem constant byte address 0x4 - core index']
  #allocation1 [shape = 'u32[72,128]{1,0:T(1,128)}', space=vmem, size = 0x9000, scoped, tag = 'internal scratch']
  #allocation2 [shape = 'f32[1,1]{1,0:T(1,128)S(1)}', space=vmem, size = 0x200, scoped, tag = 'scoped memory for deepfm_forward.1']
  %s0 = inlined_call_operand.vmem [shape: bf16[128,128], index: 0, kind: input, shape index: {}]
  %s1 = inlined_call_operand.vmem [shape: f32[1,128], index: 1, kind: input, shape index: {}]
  %s2 = inlined_call_operand.vmem [shape: f32[80,128], index: 2, kind: input, shape index: {}]
  %s3 = inlined_call_operand.vmem [shape: f32[64,1], index: 3, kind: input, shape index: {}]
  %s4 = inlined_call_operand.vmem [shape: f32[32,64], index: 4, kind: input, shape index: {}]
  %s5 = inlined_call_operand.vmem [shape: f32[32,1], index: 5, kind: input, shape index: {}]
  %s6 = inlined_call_operand.vmem [shape: f32[32,1], index: 6, kind: input, shape index: {}]
  %s7 = inlined_call_operand.<no memory space> [shape: f32[1,1], index: 7, kind: input, shape index: {}]
  %s8 = inlined_call_operand.vmem [shape: f32[1,128], index: 8, kind: output, shape index: {}]
  %s9 = sld [smem:[#allocation0]]
  $region42: #{deepfm_forward.1} parent=0
    _
  %s11 = ssub.s32 1, %s9
  %s12 = scalar_select 0, %s11, %s9
  %v13 = vstv %s7
  %14 = vst [vmem:[#allocation2] sm:$0x1] %v13
  // Predicated region
  $region2: #{deepfm_forward.1} parent=0 // pred_check
    _
  $region3: #{deepfm_forward.1} parent=0 // pred_check_branch
    %16 = sbr.rel (0) target = $region5
  $region4: #{deepfm_forward.1} parent=0 // pred_region
    _
  $region5: #{deepfm_forward.1} parent=0 // pred_fallthru
    _
  // Predicated region
  $region6: #{deepfm_forward.1} parent=0 // pred_check
    _
  $region7: #{deepfm_forward.1} parent=0 // pred_check_branch
    %18 = sbr.rel (0) target = $region9
  $region8: #{deepfm_forward.1} parent=0 // pred_region
    _
  $region9: #{deepfm_forward.1} parent=0 // pred_fallthru
    _
  // Predicated region
  $region10: #{deepfm_forward.1} parent=0 // pred_check
    _
  $region11: #{deepfm_forward.1} parent=0 // pred_check_branch
    %20 = sbr.rel (0) target = $region13
  $region12: #{deepfm_forward.1} parent=0 // pred_region
    _
  $region13: #{deepfm_forward.1} parent=0 // pred_fallthru
    _
  // Predicated region
  $region14: #{deepfm_forward.1} parent=0 // pred_check
    _
  $region15: #{deepfm_forward.1} parent=0 // pred_check_branch
    %22 = sbr.rel (0) target = $region17
  $region16: #{deepfm_forward.1} parent=0 // pred_region
    _
  $region17: #{deepfm_forward.1} parent=0 // pred_fallthru
    _
  // Predicated region
  $region18: #{deepfm_forward.1} parent=0 // pred_check
    _
  $region19: #{deepfm_forward.1} parent=0 // pred_check_branch
    %24 = sbr.rel (0) target = $region21
  $region20: #{deepfm_forward.1} parent=0 // pred_region
    _
  $region21: #{deepfm_forward.1} parent=0 // pred_fallthru
    _
  // Predicated region
  $region22: #{deepfm_forward.1} parent=0 // pred_check
    _
  $region23: #{deepfm_forward.1} parent=0 // pred_check_branch
    %26 = sbr.rel (0) target = $region25
  $region24: #{deepfm_forward.1} parent=0 // pred_region
    _
  $region25: #{deepfm_forward.1} parent=0 // pred_fallthru
    _
  // Predicated region
  $region26: #{deepfm_forward.1} parent=0 // pred_check
    _
  $region27: #{deepfm_forward.1} parent=0 // pred_check_branch
    %28 = sbr.rel (0) target = $region29
  $region28: #{deepfm_forward.1} parent=0 // pred_region
    _
  $region29: #{deepfm_forward.1} parent=0 // pred_fallthru
    _
  // Predicated region
  $region30: #{deepfm_forward.1} parent=0 // pred_check
    _
  $region31: #{deepfm_forward.1} parent=0 // pred_check_branch
    %30 = sbr.rel (0) target = $region33
  $region32: #{deepfm_forward.1} parent=0 // pred_region
    _
  $region33: #{deepfm_forward.1} parent=0 // pred_fallthru
    _
  %v31 = vld [vmem:[%s0] sm:$0xf]
  %v32 = vld [vmem:[%s0 + $0x4] sm:$0xf]
  %v33 = vld [vmem:[%s0 + $0x8] sm:$0xf]
  %v34 = vld [vmem:[%s0 + $0xc] sm:$0xf]
  %v35 = vld [vmem:[%s0 + $0x10] sm:$0xf]
  %v36 = vld [vmem:[%s0 + $0x14] sm:$0xf]
  %v37 = vld [vmem:[%s0 + $0x18] sm:$0xf]
  %v38 = vld [vmem:[%s0 + $0x1c] sm:$0xf]
  %v39 = vld [vmem:[%s0 + $0x20] sm:$0xf]
  %v40 = vld [vmem:[%s0 + $0x24] sm:$0xf]
  %v41 = vld [vmem:[%s0 + $0x28] sm:$0xf]
  %v42 = vld [vmem:[%s0 + $0x2c] sm:$0xf]
  %v43 = vld [vmem:[%s0 + $0x30] sm:$0xf]
  %v44 = vld [vmem:[%s0 + $0x34] sm:$0xf]
  %v45 = vld [vmem:[%s0 + $0x38] sm:$0xf]
  %v46 = vld [vmem:[%s0 + $0x3c] sm:$0xf]
  %v47 = vunpack.c.l.bf16 %v31
  %v48 = vunpack.c.l.bf16 %v32
  %v49 = vunpack.c.l.bf16 %v33
  %v50 = vunpack.c.l.bf16 %v34
  %v51 = vunpack.c.l.bf16 %v35
  %v52 = vunpack.c.l.bf16 %v36
  %v53 = vunpack.c.l.bf16 %v37
  %v54 = vunpack.c.l.bf16 %v38
  %v55 = vunpack.c.l.bf16 %v39
  %v56 = vunpack.c.l.bf16 %v40
  %v57 = vunpack.c.l.bf16 %v41
  %v58 = vunpack.c.l.bf16 %v42
  %v59 = vunpack.c.l.bf16 %v43
  %v60 = vunpack.c.l.bf16 %v44
  %v61 = vunpack.c.l.bf16 %v45
  %v62 = vunpack.c.l.bf16 %v46
  %v63 = vld [vmem:[%s2] sm:$0xff]
  %v64 = vld [vmem:[%s2 + $0x8] sm:$0xff]
  %v65 = vld [vmem:[%s2 + $0x10] sm:$0xff]
  %v66 = vld [vmem:[%s2 + $0x18] sm:$0xff]
  %v67 = vld [vmem:[%s2 + $0x20] sm:$0xff]
  %v68 = vld [vmem:[%s2 + $0x28] sm:$0xff]
  %v69 = vld [vmem:[%s2 + $0x30] sm:$0xff]
  %v70 = vld [vmem:[%s2 + $0x38] sm:$0xff]
  %v71 = vld [vmem:[%s2 + $0x40] sm:$0xff]
  %v72 = vld [vmem:[%s2 + $0x48] sm:$0xff]
  %73 = vmatpush.msra.mxu0 %v62
  %74 = vmatpush.msra.mxu0 %v61
  %75 = vmatpush.msra.mxu0 %v60
  %76 = vmatpush.msra.mxu0 %v59
  %77 = vmatpush.msra.mxu0 %v58
  %78 = vmatpush.msra.mxu0 %v57
  %79 = vmatpush.msra.mxu0 %v56
  %80 = vmatpush.msra.mxu0 %v55
  %81 = vmatpush.msra.mxu0 %v54
  %82 = vmatpush.msra.mxu0 %v53
  %83 = vmatpush.msra.mxu0 %v52
  %84 = vmatpush.msra.mxu0 %v51
  %85 = vmatpush.msra.mxu0 %v50
  %86 = vmatpush.msra.mxu0 %v49
  %87 = vmatpush.msra.mxu0 %v48
  %88 = vmatpush.msra.mxu0 %v47
  %89 = vmatmul.f32.gmra.mxu0 %v63
  %v90 = vpop.f32.mrf.mxu0
  %v91 = vadd.f32 0.0, %v90
  %92 = vmatmul.f32.gmra.mxu0 %v64
  %v93 = vpop.f32.mrf.mxu0
  %v94 = vadd.f32 0.0, %v93
  %95 = vmatmul.f32.gmra.mxu0 %v65
  %v96 = vpop.f32.mrf.mxu0
  %v97 = vadd.f32 0.0, %v96
  %98 = vmatmul.f32.gmra.mxu0 %v66
  %v99 = vpop.f32.mrf.mxu0
  %v100 = vadd.f32 0.0, %v99
  %101 = vmatmul.f32.gmra.mxu0 %v67
  %v102 = vpop.f32.mrf.mxu0
  %v103 = vadd.f32 0.0, %v102
  %104 = vmatmul.f32.gmra.mxu0 %v68
  %v105 = vpop.f32.mrf.mxu0
  %v106 = vadd.f32 0.0, %v105
  %107 = vmatmul.f32.gmra.mxu0 %v69
  %v108 = vpop.f32.mrf.mxu0
  %v109 = vadd.f32 0.0, %v108
  %110 = vmatmul.f32.gmra.mxu0 %v70
  %v111 = vpop.f32.mrf.mxu0
  %v112 = vadd.f32 0.0, %v111
  %113 = vmatmul.f32.gmra.mxu0 %v71
  %v114 = vpop.f32.mrf.mxu0
  %v115 = vadd.f32 0.0, %v114
  %116 = vmatmul.f32.gmra.mxu0 %v72
  %v117 = vpop.f32.mrf.mxu0
  %v118 = vadd.f32 0.0, %v117
  %119 = vdwg.mxu0
  %v120 = vmul.f32 %v91, %v91
  %v121 = vmul.f32 %v94, %v94
  %v122 = vadd.f32 %v120, %v121
  %v123 = vrot.slane %v122, 4
  %v124 = vadd.f32 %v122, %v123
  %v125 = vrot.slane %v124, 2
  %v126 = vadd.f32 %v124, %v125
  %v127 = vrot.slane %v126, 1
  %v128 = vadd.f32 %v126, %v127
  %v129 = vmul.f32 %v47, %v47
  %v130 = vmul.f32 %v48, %v48
  %v131 = vmul.f32 %v49, %v49
  %v132 = vmul.f32 %v50, %v50
  %v133 = vmul.f32 %v51, %v51
  %v134 = vmul.f32 %v52, %v52
  %v135 = vmul.f32 %v53, %v53
  %v136 = vmul.f32 %v54, %v54
  %v137 = vmul.f32 %v55, %v55
  %v138 = vmul.f32 %v56, %v56
  %v139 = vmul.f32 %v57, %v57
  %v140 = vmul.f32 %v58, %v58
  %v141 = vmul.f32 %v59, %v59
  %v142 = vmul.f32 %v60, %v60
  %v143 = vmul.f32 %v61, %v61
  %v144 = vmul.f32 %v62, %v62
  %v145 = vadd.f32 %v129, %v130
  %v146 = vadd.f32 %v145, %v131
  %v147 = vadd.f32 %v146, %v132
  %v148 = vadd.f32 %v147, %v133
  %v149 = vadd.f32 %v148, %v134
  %v150 = vadd.f32 %v149, %v135
  %v151 = vadd.f32 %v150, %v136
  %v152 = vadd.f32 %v151, %v137
  %v153 = vadd.f32 %v152, %v138
  %v154 = vadd.f32 %v153, %v139
  %v155 = vadd.f32 %v154, %v140
  %v156 = vadd.f32 %v155, %v141
  %v157 = vadd.f32 %v156, %v142
  %v158 = vadd.f32 %v157, %v143
  %v159 = vadd.f32 %v158, %v144
  %v160 = vrot.slane %v159, 4
  %v161 = vadd.f32 %v159, %v160
  %v162 = vrot.slane %v161, 2
  %v163 = vadd.f32 %v161, %v162
  %v164 = vrot.slane %v163, 1
  %v165 = vadd.f32 %v163, %v164
  %v166 = vsub.f32 %v128, %v165
  %v167 = vmul.f32 %v166, 0.5
  %v168 = vld [vmem:[%s3] sm:$0xff]
  %v169 = vld [vmem:[%s3 + $0x8] sm:$0xff]
  %v170 = vld [vmem:[%s3 + $0x10] sm:$0xff]
  %v171 = vld [vmem:[%s3 + $0x18] sm:$0xff]
  %v172 = vld [vmem:[%s3 + $0x20] sm:$0xff]
  %v173 = vld [vmem:[%s3 + $0x28] sm:$0xff]
  %v174 = vld [vmem:[%s3 + $0x30] sm:$0xff]
  %v175 = vld [vmem:[%s3 + $0x38] sm:$0xff]
  %177 = vset.pattern.permute.xlu0 0
  %178 = vperm.xlu0 %177, %v168
  %v179 = vpop.permute.xlu0 %178
  %182 = vset.pattern.permute.xlu0 0
  %183 = vperm.xlu0 %182, %v169
  %v184 = vpop.permute.xlu0 %183
  %187 = vset.pattern.permute.xlu0 0
  %188 = vperm.xlu0 %187, %v170
  %v189 = vpop.permute.xlu0 %188
  %192 = vset.pattern.permute.xlu0 0
  %193 = vperm.xlu0 %192, %v171
  %v194 = vpop.permute.xlu0 %193
  %197 = vset.pattern.permute.xlu0 0
  %198 = vperm.xlu0 %197, %v172
  %v199 = vpop.permute.xlu0 %198
  %202 = vset.pattern.permute.xlu0 0
  %203 = vperm.xlu0 %202, %v173
  %v204 = vpop.permute.xlu0 %203
  %207 = vset.pattern.permute.xlu0 0
  %208 = vperm.xlu0 %207, %v174
  %v209 = vpop.permute.xlu0 %208
  %212 = vset.pattern.permute.xlu0 0
  %213 = vperm.xlu0 %212, %v175
  %v214 = vpop.permute.xlu0 %213
  %v216 = vadd.f32 %v97, %v179
  %v217 = vadd.f32 %v100, %v184
  %v218 = vadd.f32 %v103, %v189
  %v219 = vadd.f32 %v106, %v194
  %v220 = vadd.f32 %v109, %v199
  %v221 = vadd.f32 %v112, %v204
  %v222 = vadd.f32 %v115, %v209
  %v223 = vadd.f32 %v118, %v214
  %v224 = vmax.f32 %v216, 0.0
  %v225 = vmax.f32 %v217, 0.0
  %v226 = vmax.f32 %v218, 0.0
  %v227 = vmax.f32 %v219, 0.0
  %v228 = vmax.f32 %v220, 0.0
  %v229 = vmax.f32 %v221, 0.0
  %v230 = vmax.f32 %v222, 0.0
  %v231 = vmax.f32 %v223, 0.0
  %v232 = vld [vmem:[%s4] sm:$0xff]
  %v233 = vld [vmem:[%s4 + $0x8] sm:$0xff]
  %v234 = vld [vmem:[%s4 + $0x10] sm:$0xff]
  %v235 = vld [vmem:[%s4 + $0x18] sm:$0xff]
  %v236 = vld [vmem:[%s5] sm:$0xff]
  %v237 = vld [vmem:[%s5 + $0x8] sm:$0xff]
  %v238 = vld [vmem:[%s5 + $0x10] sm:$0xff]
  %v239 = vld [vmem:[%s5 + $0x18] sm:$0xff]
  %241 = vset.pattern.permute.xlu0 0
  %242 = vperm.xlu0 %241, %v236
  %v243 = vpop.permute.xlu0 %242
  %246 = vset.pattern.permute.xlu0 0
  %247 = vperm.xlu0 %246, %v237
  %v248 = vpop.permute.xlu0 %247
  %251 = vset.pattern.permute.xlu0 0
  %252 = vperm.xlu0 %251, %v238
  %v253 = vpop.permute.xlu0 %252
  %256 = vset.pattern.permute.xlu0 0
  %257 = vperm.xlu0 %256, %v239
  %v258 = vpop.permute.xlu0 %257
  %vm260 = vcmask 523264
  %v262 = vsel %vm260, %v232, 0
  %v265 = vsel %vm260, %v233, 0
  %v268 = vsel %vm260, %v234, 0
  %v271 = vsel %vm260, %v235, 0
  %273 = vmatpush.msra.mxu0 0.0
  %274 = vmatpush.msra.mxu0 0.0
  %275 = vmatpush.msra.mxu0 0.0
  %276 = vmatpush.msra.mxu0 0.0
  %277 = vmatpush.msra.mxu0 0.0
  %278 = vmatpush.msra.mxu0 0.0
  %279 = vmatpush.msra.mxu0 0.0
  %280 = vmatpush.msra.mxu0 0.0
  %281 = vmatpush.msra.mxu0 %v231
  %282 = vmatpush.msra.mxu0 %v230
  %283 = vmatpush.msra.mxu0 %v229
  %284 = vmatpush.msra.mxu0 %v228
  %285 = vmatpush.msra.mxu0 %v227
  %286 = vmatpush.msra.mxu0 %v226
  %287 = vmatpush.msra.mxu0 %v225
  %288 = vmatpush.msra.mxu0 %v224
  %289 = vmatmul.f32.gmra.mxu0 %v262
  %v290 = vpop.f32.mrf.mxu0
  %v291 = vadd.f32 %v243, %v290
  %292 = vmatmul.f32.gmra.mxu0 %v265
  %v293 = vpop.f32.mrf.mxu0
  %v294 = vadd.f32 %v248, %v293
  %295 = vmatmul.f32.gmra.mxu0 %v268
  %v296 = vpop.f32.mrf.mxu0
  %v297 = vadd.f32 %v253, %v296
  %298 = vmatmul.f32.gmra.mxu0 %v271
  %v299 = vpop.f32.mrf.mxu0
  %v300 = vadd.f32 %v258, %v299
  %301 = vdwg.mxu0
  %v302 = vmax.f32 %v291, 0.0
  %v303 = vmax.f32 %v294, 0.0
  %v304 = vmax.f32 %v297, 0.0
  %v305 = vmax.f32 %v300, 0.0
  %v306 = vld [vmem:[%s6] sm:$0xff]
  %v307 = vld [vmem:[%s6 + $0x8] sm:$0xff]
  %v308 = vld [vmem:[%s6 + $0x10] sm:$0xff]
  %v309 = vld [vmem:[%s6 + $0x18] sm:$0xff]
  %311 = vset.pattern.permute.xlu0 0
  %312 = vperm.xlu0 %311, %v306
  %v313 = vpop.permute.xlu0 %312
  %316 = vset.pattern.permute.xlu0 0
  %317 = vperm.xlu0 %316, %v307
  %v318 = vpop.permute.xlu0 %317
  %321 = vset.pattern.permute.xlu0 0
  %322 = vperm.xlu0 %321, %v308
  %v323 = vpop.permute.xlu0 %322
  %326 = vset.pattern.permute.xlu0 0
  %327 = vperm.xlu0 %326, %v309
  %v328 = vpop.permute.xlu0 %327
  %v330 = vmul.f32 %v302, %v313
  %v331 = vmul.f32 %v303, %v318
  %v332 = vmul.f32 %v304, %v323
  %v333 = vmul.f32 %v305, %v328
  %v334 = vadd.f32 %v330, %v331
  %v335 = vadd.f32 %v334, %v332
  %v336 = vadd.f32 %v335, %v333
  %v337 = vrot.slane %v336, 4
  %v338 = vadd.f32 %v336, %v337
  %v339 = vrot.slane %v338, 2
  %v340 = vadd.f32 %v338, %v339
  %v341 = vrot.slane %v340, 1
  %v342 = vadd.f32 %v340, %v341
  %v343 = vld [vmem:[#allocation2] sm:$0x1]
  %345 = vset.pattern.permute.xlu0 0
  %346 = vperm.xlu0 %345, %v343
  %v347 = vpop.permute.xlu0 %346
  %v349 = vperm.slane %v347, 0
  %v350 = vadd.f32 %v342, %v349
  %v351 = vld [vmem:[%s1] sm:$0x1]
  %v352 = vadd.f32 %v351, %v167
  %v353 = vadd.f32 %v352, %v350
  %354 = vst [vmem:[%s8] sm:$0x1] %v353
  // Predicated region
  $region34: #{deepfm_forward.1} parent=0 // pred_check
    _
  $region35: #{deepfm_forward.1} parent=0 // pred_check_branch
    %356 = sbr.rel (0) target = $region37
  $region36: #{deepfm_forward.1} parent=0 // pred_region
    _
  $region37: #{deepfm_forward.1} parent=0 // pred_fallthru
    _
  // Predicated region
  $region38: #{deepfm_forward.1} parent=0 // pred_check
    _
  $region39: #{deepfm_forward.1} parent=0 // pred_check_branch
    %358 = sbr.rel (0) target = $region41
  $region40: #{deepfm_forward.1} parent=0 // pred_region
    _
  $region41: #{deepfm_forward.1} parent=0 // pred_fallthru
    _

</llo_original>
